<compile_context>
chip_gen: v6e
topology: v6e:2x2x1
jax: 0.10.0
libtpu: 0.0.40
codegen_flags: <defaults>
</compile_context>

<pallas_src>
import functools

import jax
import jax.numpy as jnp
from jax.experimental import pallas as pl
from jax.experimental.pallas import tpu as pltpu

LANE = 128             # lane width (last dim of every tile)
MAX_BLOCK_ROWS = 2048  # 2048*128*4B = 1 MiB per f32 input per pipeline buffer
NUM_CORE_SPLITS = 2    # leading "parallel" axis; sharded across TCs on v7x


def _round_up(x, m):
    return ((x + m - 1) // m) * m


def _sublane_rows(dtype):
    """Packed sublane multiple for a dtype: 8 (4B), 16 (2B), 32 (1B)."""
    itemsize = jnp.dtype(dtype).itemsize
    return max(8, 32 // max(1, itemsize))


def _dice_kernel(p_ref, t_ref, pt_ref, sum_ref, *, rows, block_rows, chunk,
                 steps_per_split, mask_start_blk):
    """Streams (block_rows, 128) tiles; accumulates sum(p*t) and sum(p)+sum(t)
    partials into per-core (8, 128) output slabs."""
    c = pl.program_id(0)          # core-split index ("parallel")
    i = pl.program_id(1)          # step within this split ("arbitrary")
    gblk = c * steps_per_split + i  # global (unclamped) row-block index

    @pl.when(i == 0)
    def _init():
        pt_ref[...] = jnp.zeros_like(pt_ref)
        sum_ref[...] = jnp.zeros_like(sum_ref)

    groups = block_rows // chunk

    # Hot path: fully-valid blocks, no masking. Small chunked loop keeps all
    # temporaries at vreg size (2 vld per data-vreg pair, 0 vst).
    @pl.when(gblk < mask_start_blk)
    def _hot():
        def body(g, carry):
            acc_pt, acc_s = carry
            off = pl.multiple_of(g * chunk, chunk)
            pv = p_ref[pl.ds(off, chunk), :].astype(jnp.float32)
            tv = t_ref[pl.ds(off, chunk), :].astype(jnp.float32)
            acc_pt = acc_pt + (pv * tv).reshape(-1, 8, LANE).sum(axis=0)
            acc_s = acc_s + (pv + tv).reshape(-1, 8, LANE).sum(axis=0)
            return acc_pt, acc_s

        zero = jnp.zeros((8, LANE), jnp.float32)
        acc_pt, acc_s = jax.lax.fori_loop(
            0, groups, body, (zero, zero), unroll=min(8, groups))
        pt_ref[...] += acc_pt
        sum_ref[...] += acc_s

    # Cold path: trailing partial block and/or clamped duplicate blocks.
    # Mask rows past the real array extent (garbage/NaN never reaches sums).
    @pl.when(gblk >= mask_start_blk)
    def _cold():
        p = p_ref[...].astype(jnp.float32)
        t = t_ref[...].astype(jnp.float32)
        row = jax.lax.broadcasted_iota(jnp.int32, p.shape, 0) + gblk * block_rows
        valid = row < rows
        p = jnp.where(valid, p, 0.0)
        t = jnp.where(valid, t, 0.0)
        pt_ref[...] += (p * t).reshape(-1, 8, LANE).sum(axis=0)
        sum_ref[...] += (p + t).reshape(-1, 8, LANE).sum(axis=0)


def soft_dice_loss(y_pred, y_true, smooth=1.0):
    assert y_pred.shape == y_true.shape, (
        "Las dimensiones de predicción y verdad deben coincidir.")

    p_flat = y_pred.reshape(-1)
    t_flat = y_true.reshape(-1)
    n = p_flat.shape[0]
    n_main = (n // LANE) * LANE

    # <128-element tail handled with a tiny JAX epilogue (no padded copies).
    tail_pt = jnp.float32(0.0)
    tail_sum = jnp.float32(0.0)
    if n_main != n:
        p_tail = p_flat[n_main:].astype(jnp.float32)
        t_tail = t_flat[n_main:].astype(jnp.float32)
        tail_pt = jnp.sum(p_tail * t_tail)
        tail_sum = jnp.sum(p_tail) + jnp.sum(t_tail)

    if n_main == 0:
        # Degenerate case: fewer than 128 elements total.
        intersection = tail_pt
        denominator = tail_sum
    else:
        rows = n_main // LANE
        p2 = (p_flat if n_main == n else p_flat[:n_main]).reshape(rows, LANE)
        t2 = (t_flat if n_main == n else t_flat[:n_main]).reshape(rows, LANE)

        # Sublane alignment for native-dtype streaming (8/16/32 rows).
        align = max(_sublane_rows(p2.dtype), _sublane_rows(t2.dtype))
        block_rows = min(MAX_BLOCK_ROWS, _round_up(rows, align))
        num_blocks = pl.cdiv(rows, block_rows)
        num_splits = min(NUM_CORE_SPLITS, num_blocks)
        steps_per_split = pl.cdiv(num_blocks, num_splits)
        # Blocks with global index >= mask_start_blk take the masked path
        # (partial trailing block and/or clamped duplicate blocks).
        mask_start_blk = num_blocks - 1 if rows % block_rows else num_blocks

        kernel = functools.partial(
            _dice_kernel,
            rows=rows,
            block_rows=block_rows,
            chunk=align,
            steps_per_split=steps_per_split,
            mask_start_blk=mask_start_blk,
        )

        def in_map(c, i):
            # Clamp so duplicate blocks (when num_blocks is not a multiple of
            # num_splits) re-read a valid block; the kernel masks them to 0.
            return (jnp.minimum(c * steps_per_split + i, num_blocks - 1), 0)

        pt_part, sum_part = pl.pallas_call(
            kernel,
            out_shape=(
                jax.ShapeDtypeStruct((num_splits, 8, LANE), jnp.float32),
                jax.ShapeDtypeStruct((num_splits, 8, LANE), jnp.float32),
            ),
            grid_spec=pltpu.PrefetchScalarGridSpec(
                num_scalar_prefetch=0,
                grid=(num_splits, steps_per_split),
                in_specs=[
                    pl.BlockSpec((block_rows, LANE), in_map),
                    pl.BlockSpec((block_rows, LANE), in_map),
                ],
                out_specs=[
                    pl.BlockSpec((None, 8, LANE), lambda c, i: (c, 0, 0)),
                    pl.BlockSpec((None, 8, LANE), lambda c, i: (c, 0, 0)),
                ],
            ),
            compiler_params=pltpu.CompilerParams(
                dimension_semantics=("parallel", "arbitrary")),
        )(p2, t2)

        intersection = jnp.sum(pt_part) + tail_pt
        denominator = jnp.sum(sum_part) + tail_sum

    smooth = jnp.float32(smooth)
    soft_dice = (2.0 * intersection + smooth) / (denominator + smooth)
    return 1.0 - soft_dice


def soft_dice_loss_ref(y_pred, y_true, smooth=1.0):
    p = y_pred.reshape(-1).astype(jnp.float32)
    t = y_true.reshape(-1).astype(jnp.float32)
    intersection = jnp.sum(p * t)
    denominator = jnp.sum(p) + jnp.sum(t)
    return 1.0 - (2.0 * intersection + smooth) / (denominator + smooth)


if __name__ == "__main__":
    key = jax.random.PRNGKey(0)
    k1, k2 = jax.random.split(key)

    # NCHW inputs, as the PyTorch module would receive (sigmoid probs vs mask).
    shape = (2, 4, 16, 16)
    y_pred = jax.nn.sigmoid(jax.random.normal(k1, shape, dtype=jnp.float32))
    y_true = (jax.random.uniform(k2, shape, dtype=jnp.float32) > 0.5).astype(
        jnp.float32)

    loss = jax.block_until_ready(soft_dice_loss(y_pred, y_true, smooth=1.0))
    ref = jax.block_until_ready(soft_dice_loss_ref(y_pred, y_true, smooth=1.0))

    assert jnp.allclose(loss, ref, rtol=1e-5, atol=1e-6), (loss, ref)
    print("KERNEL_OK")
</pallas_src>

<mosaic_0001>
module attributes {stable_mosaic.version = 11 : i64} {
  func.func @_dice_kernel(%arg0: i32, %arg1: i32, %arg2: memref<16x128xf32, #tpu.memory_space<vmem>>, %arg3: memref<16x128xf32, #tpu.memory_space<vmem>>, %arg4: memref<1x8x128xf32, #tpu.memory_space<vmem>>, %arg5: memref<1x8x128xf32, #tpu.memory_space<vmem>>) attributes {dimension_semantics = [#tpu.dimension_semantics<parallel>, #tpu.dimension_semantics<arbitrary>], iteration_bounds = array<i64: 1, 1>, scalar_prefetch = 0 : i64, scratch_operands = 0 : i64, tpu.core_type = #tpu.core_type<tc>, window_params = [{transform_indices = @transform_0, window_bounds = array<i64: 16, 128>}, {transform_indices = @transform_1, window_bounds = array<i64: 16, 128>}, {transform_indices = @transform_2, window_bounds = array<i64: 1, 8, 128>}, {transform_indices = @transform_3, window_bounds = array<i64: 1, 8, 128>}]} {
    %c1_i32 = arith.constant 1 : i32
    %0 = arith.muli %arg0, %c1_i32 : i32
    %1 = arith.addi %0, %arg1 : i32
    %c0_i32 = arith.constant 0 : i32
    %2 = arith.cmpi eq, %arg1, %c0_i32 : i32
    %3 = arith.extui %2 : i1 to i32
    %c0_i32_0 = arith.constant 0 : i32
    %4 = arith.cmpi ne, %3, %c0_i32_0 : i32
    scf.if %4 {
      %cst = arith.constant 0.000000e+00 : f32
      %11 = vector.broadcast %cst : f32 to vector<8x128xf32>
      %c0 = arith.constant 0 : index
      %c0_5 = arith.constant 0 : index
      %c0_6 = arith.constant 0 : index
      %12 = vector.load %arg4[%c0, %c0_5, %c0_6] : memref<1x8x128xf32, #tpu.memory_space<vmem>>, vector<1x8x128xf32>
      %13 = vector.shape_cast %12 : vector<1x8x128xf32> to vector<8x128xf32>
      %14 = vector.shape_cast %11 : vector<8x128xf32> to vector<1x8x128xf32>
      tpu.vector_store %arg4[%c0, %c0_5, %c0_6], %14 {strides = array<i32>} : memref<1x8x128xf32, #tpu.memory_space<vmem>>, vector<1x8x128xf32>,
      %cst_7 = arith.constant 0.000000e+00 : f32
      %15 = vector.broadcast %cst_7 : f32 to vector<8x128xf32>
      %c0_8 = arith.constant 0 : index
      %c0_9 = arith.constant 0 : index
      %c0_10 = arith.constant 0 : index
      %16 = vector.load %arg5[%c0_8, %c0_9, %c0_10] : memref<1x8x128xf32, #tpu.memory_space<vmem>>, vector<1x8x128xf32>
      %17 = vector.shape_cast %16 : vector<1x8x128xf32> to vector<8x128xf32>
      %18 = vector.shape_cast %15 : vector<8x128xf32> to vector<1x8x128xf32>
      tpu.vector_store %arg5[%c0_8, %c0_9, %c0_10], %18 {strides = array<i32>} : memref<1x8x128xf32, #tpu.memory_space<vmem>>, vector<1x8x128xf32>,
    } else {
    }
    %c1_i32_1 = arith.constant 1 : i32
    %5 = arith.cmpi slt, %1, %c1_i32_1 : i32
    %6 = arith.extui %5 : i1 to i32
    %c0_i32_2 = arith.constant 0 : i32
    %7 = arith.cmpi ne, %6, %c0_i32_2 : i32
    scf.if %7 {
      %cst = arith.constant 0.000000e+00 : f32
      %11 = vector.broadcast %cst : f32 to vector<8x128xf32>
      %c0_i32_5 = arith.constant 0 : i32
      %c8_i32 = arith.constant 8 : i32
      %12 = arith.muli %c0_i32_5, %c8_i32 : i32
      %13 = tpu.assume_multiple %12, 8 : i32
      %14 = arith.index_cast %13 : i32 to index
      %c0 = arith.constant 0 : index
      %15 = vector.load %arg2[%14, %c0] : memref<16x128xf32, #tpu.memory_space<vmem>>, vector<8x128xf32>
      %16 = arith.index_cast %13 : i32 to index
      %c0_6 = arith.constant 0 : index
      %17 = vector.load %arg3[%16, %c0_6] : memref<16x128xf32, #tpu.memory_space<vmem>>, vector<8x128xf32>
      %18 = arith.mulf %15, %17 : vector<8x128xf32>
      %19 = vector.shape_cast %18 : vector<8x128xf32> to vector<1x8x128xf32>
      %cst_7 = arith.constant dense<0.000000e+00> : vector<8x128xf32>
      %20 = vector.multi_reduction <add>, %19, %cst_7 [0] : vector<1x8x128xf32> to vector<8x128xf32>
      %21 = arith.addf %11, %20 : vector<8x128xf32>
      %22 = arith.addf %15, %17 : vector<8x128xf32>
      %23 = vector.shape_cast %22 : vector<8x128xf32> to vector<1x8x128xf32>
      %cst_8 = arith.constant dense<0.000000e+00> : vector<8x128xf32>
      %24 = vector.multi_reduction <add>, %23, %cst_8 [0] : vector<1x8x128xf32> to vector<8x128xf32>
      %25 = arith.addf %11, %24 : vector<8x128xf32>
      %c1_i32_9 = arith.constant 1 : i32
      %c8_i32_10 = arith.constant 8 : i32
      %26 = arith.muli %c1_i32_9, %c8_i32_10 : i32
      %27 = tpu.assume_multiple %26, 8 : i32
      %28 = arith.index_cast %27 : i32 to index
      %c0_11 = arith.constant 0 : index
      %29 = vector.load %arg2[%28, %c0_11] : memref<16x128xf32, #tpu.memory_space<vmem>>, vector<8x128xf32>
      %30 = arith.index_cast %27 : i32 to index
      %c0_12 = arith.constant 0 : index
      %31 = vector.load %arg3[%30, %c0_12] : memref<16x128xf32, #tpu.memory_space<vmem>>, vector<8x128xf32>
      %32 = arith.mulf %29, %31 : vector<8x128xf32>
      %33 = vector.shape_cast %32 : vector<8x128xf32> to vector<1x8x128xf32>
      %cst_13 = arith.constant dense<0.000000e+00> : vector<8x128xf32>
      %34 = vector.multi_reduction <add>, %33, %cst_13 [0] : vector<1x8x128xf32> to vector<8x128xf32>
      %35 = arith.addf %21, %34 : vector<8x128xf32>
      %36 = arith.addf %29, %31 : vector<8x128xf32>
      %37 = vector.shape_cast %36 : vector<8x128xf32> to vector<1x8x128xf32>
      %cst_14 = arith.constant dense<0.000000e+00> : vector<8x128xf32>
      %38 = vector.multi_reduction <add>, %37, %cst_14 [0] : vector<1x8x128xf32> to vector<8x128xf32>
      %39 = arith.addf %25, %38 : vector<8x128xf32>
      %c2_i32 = arith.constant 2 : i32
      %c0_15 = arith.constant 0 : index
      %c0_16 = arith.constant 0 : index
      %c0_17 = arith.constant 0 : index
      %40 = vector.load %arg4[%c0_15, %c0_16, %c0_17] : memref<1x8x128xf32, #tpu.memory_space<vmem>>, vector<1x8x128xf32>
      %41 = vector.shape_cast %40 : vector<1x8x128xf32> to vector<8x128xf32>
      %42 = arith.addf %41, %35 : vector<8x128xf32>
      %c0_18 = arith.constant 0 : index
      %c0_19 = arith.constant 0 : index
      %c0_20 = arith.constant 0 : index
      %43 = vector.load %arg4[%c0_18, %c0_19, %c0_20] : memref<1x8x128xf32, #tpu.memory_space<vmem>>, vector<1x8x128xf32>
      %44 = vector.shape_cast %43 : vector<1x8x128xf32> to vector<8x128xf32>
      %45 = vector.shape_cast %42 : vector<8x128xf32> to vector<1x8x128xf32>
      tpu.vector_store %arg4[%c0_18, %c0_19, %c0_20], %45 {strides = array<i32>} : memref<1x8x128xf32, #tpu.memory_space<vmem>>, vector<1x8x128xf32>,
      %c0_21 = arith.constant 0 : index
      %c0_22 = arith.constant 0 : index
      %c0_23 = arith.constant 0 : index
      %46 = vector.load %arg5[%c0_21, %c0_22, %c0_23] : memref<1x8x128xf32, #tpu.memory_space<vmem>>, vector<1x8x128xf32>
      %47 = vector.shape_cast %46 : vector<1x8x128xf32> to vector<8x128xf32>
      %48 = arith.addf %47, %39 : vector<8x128xf32>
      %c0_24 = arith.constant 0 : index
      %c0_25 = arith.constant 0 : index
      %c0_26 = arith.constant 0 : index
      %49 = vector.load %arg5[%c0_24, %c0_25, %c0_26] : memref<1x8x128xf32, #tpu.memory_space<vmem>>, vector<1x8x128xf32>
      %50 = vector.shape_cast %49 : vector<1x8x128xf32> to vector<8x128xf32>
      %51 = vector.shape_cast %48 : vector<8x128xf32> to vector<1x8x128xf32>
      tpu.vector_store %arg5[%c0_24, %c0_25, %c0_26], %51 {strides = array<i32>} : memref<1x8x128xf32, #tpu.memory_space<vmem>>, vector<1x8x128xf32>,
    } else {
    }
    %c1_i32_3 = arith.constant 1 : i32
    %8 = arith.cmpi sge, %1, %c1_i32_3 : i32
    %9 = arith.extui %8 : i1 to i32
    %c0_i32_4 = arith.constant 0 : i32
    %10 = arith.cmpi ne, %9, %c0_i32_4 : i32
    scf.if %10 {
      %c0 = arith.constant 0 : index
      %c0_5 = arith.constant 0 : index
      %11 = vector.load %arg2[%c0, %c0_5] : memref<16x128xf32, #tpu.memory_space<vmem>>, vector<16x128xf32>
      %c0_6 = arith.constant 0 : index
      %c0_7 = arith.constant 0 : index
      %12 = vector.load %arg3[%c0_6, %c0_7] : memref<16x128xf32, #tpu.memory_space<vmem>>, vector<16x128xf32>
      %13 = tpu.iota {dimensions = array<i32: 0>} : vector<16x128xi32>
      %c16_i32 = arith.constant 16 : i32
      %14 = arith.muli %1, %c16_i32 : i32
      %15 = vector.broadcast %14 : i32 to vector<16x128xi32>
      %16 = arith.addi %13, %15 : vector<16x128xi32>
      %c16_i32_8 = arith.constant 16 : i32
      %17 = vector.broadcast %c16_i32_8 : i32 to vector<16x128xi32>
      %18 = arith.cmpi slt, %16, %17 : vector<16x128xi32>
      %cst = arith.constant 0.000000e+00 : f32
      %19 = vector.broadcast %cst : f32 to vector<16x128xf32>
      %20 = arith.select %18, %11, %19 : vector<16x128xi1>, vector<16x128xf32>
      %cst_9 = arith.constant 0.000000e+00 : f32
      %21 = vector.broadcast %cst_9 : f32 to vector<16x128xf32>
      %22 = arith.select %18, %12, %21 : vector<16x128xi1>, vector<16x128xf32>
      %c0_10 = arith.constant 0 : index
      %c0_11 = arith.constant 0 : index
      %c0_12 = arith.constant 0 : index
      %23 = vector.load %arg4[%c0_10, %c0_11, %c0_12] : memref<1x8x128xf32, #tpu.memory_space<vmem>>, vector<1x8x128xf32>
      %24 = vector.shape_cast %23 : vector<1x8x128xf32> to vector<8x128xf32>
      %25 = arith.mulf %20, %22 : vector<16x128xf32>
      %26 = vector.shape_cast %25 : vector<16x128xf32> to vector<2x8x128xf32>
      %cst_13 = arith.constant dense<0.000000e+00> : vector<8x128xf32>
      %27 = vector.multi_reduction <add>, %26, %cst_13 [0] : vector<2x8x128xf32> to vector<8x128xf32>
      %28 = arith.addf %24, %27 : vector<8x128xf32>
      %c0_14 = arith.constant 0 : index
      %c0_15 = arith.constant 0 : index
      %c0_16 = arith.constant 0 : index
      %29 = vector.load %arg4[%c0_14, %c0_15, %c0_16] : memref<1x8x128xf32, #tpu.memory_space<vmem>>, vector<1x8x128xf32>
      %30 = vector.shape_cast %29 : vector<1x8x128xf32> to vector<8x128xf32>
      %31 = vector.shape_cast %28 : vector<8x128xf32> to vector<1x8x128xf32>
      tpu.vector_store %arg4[%c0_14, %c0_15, %c0_16], %31 {strides = array<i32>} : memref<1x8x128xf32, #tpu.memory_space<vmem>>, vector<1x8x128xf32>,
      %c0_17 = arith.constant 0 : index
      %c0_18 = arith.constant 0 : index
      %c0_19 = arith.constant 0 : index
      %32 = vector.load %arg5[%c0_17, %c0_18, %c0_19] : memref<1x8x128xf32, #tpu.memory_space<vmem>>, vector<1x8x128xf32>
      %33 = vector.shape_cast %32 : vector<1x8x128xf32> to vector<8x128xf32>
      %34 = arith.addf %20, %22 : vector<16x128xf32>
      %35 = vector.shape_cast %34 : vector<16x128xf32> to vector<2x8x128xf32>
      %cst_20 = arith.constant dense<0.000000e+00> : vector<8x128xf32>
      %36 = vector.multi_reduction <add>, %35, %cst_20 [0] : vector<2x8x128xf32> to vector<8x128xf32>
      %37 = arith.addf %33, %36 : vector<8x128xf32>
      %c0_21 = arith.constant 0 : index
      %c0_22 = arith.constant 0 : index
      %c0_23 = arith.constant 0 : index
      %38 = vector.load %arg5[%c0_21, %c0_22, %c0_23] : memref<1x8x128xf32, #tpu.memory_space<vmem>>, vector<1x8x128xf32>
      %39 = vector.shape_cast %38 : vector<1x8x128xf32> to vector<8x128xf32>
      %40 = vector.shape_cast %37 : vector<8x128xf32> to vector<1x8x128xf32>
      tpu.vector_store %arg5[%c0_21, %c0_22, %c0_23], %40 {strides = array<i32>} : memref<1x8x128xf32, #tpu.memory_space<vmem>>, vector<1x8x128xf32>,
    } else {
    }
    return
  }
  func.func @transform_0(%arg0: i32, %arg1: i32) -> (i32, i32) {
    %c1_i32 = arith.constant 1 : i32
    %0 = arith.muli %arg0, %c1_i32 : i32
    %1 = arith.addi %0, %arg1 : i32
    %c0_i32 = arith.constant 0 : i32
    %2 = arith.minsi %1, %c0_i32 : i32
    %c0_i32_0 = arith.constant 0 : i32
    %c0_i32_1 = arith.constant 0 : i32
    return %2, %c0_i32_0 : i32, i32
  }
  func.func @transform_1(%arg0: i32, %arg1: i32) -> (i32, i32) {
    %c1_i32 = arith.constant 1 : i32
    %0 = arith.muli %arg0, %c1_i32 : i32
    %1 = arith.addi %0, %arg1 : i32
    %c0_i32 = arith.constant 0 : i32
    %2 = arith.minsi %1, %c0_i32 : i32
    %c0_i32_0 = arith.constant 0 : i32
    %c0_i32_1 = arith.constant 0 : i32
    return %2, %c0_i32_0 : i32, i32
  }
  func.func @transform_2(%arg0: i32, %arg1: i32) -> (i32, i32, i32) {
    %c0_i32 = arith.constant 0 : i32
    %c0_i32_0 = arith.constant 0 : i32
    %c0_i32_1 = arith.constant 0 : i32
    return %arg0, %c0_i32, %c0_i32_0 : i32, i32, i32
  }
  func.func @transform_3(%arg0: i32, %arg1: i32) -> (i32, i32, i32) {
    %c0_i32 = arith.constant 0 : i32
    %c0_i32_0 = arith.constant 0 : i32
    %c0_i32_1 = arith.constant 0 : i32
    return %arg0, %c0_i32, %c0_i32_0 : i32, i32, i32
  }
}

</mosaic_0001>

<llo_original>
// kernel: tpu_custom_call.1
$region0: #{tpu_custom_call.1}
  #allocation0 [shape = 'u32[]', space=smem, size = 0x4, offset = 0x4, fixed_abs, tag = 'smem constant byte address 0x4 - core index']
  #allocation1 [shape = 'u32[144,128]{1,0:T(1,128)}', space=vmem, size = 0x12000, scoped, tag = 'internal scratch']
  %s0 = inlined_call_operand.hbm [shape: f32[16,128], index: 0, kind: input, shape index: {}]
  %s1 = inlined_call_operand.hbm [shape: f32[16,128], index: 1, kind: input, shape index: {}]
  %s2 = inlined_call_operand.hbm [shape: f32[1,8,128], index: 2, kind: output, shape index: {0}]
  %s3 = inlined_call_operand.hbm [shape: f32[1,8,128], index: 3, kind: output, shape index: {1}]
  %4 = xla_tuple %s2, %s3
  %s5 = sld [smem:[#allocation0]]
  $region46: #{tpu_custom_call.1} parent=0
    _
  %s7 = ssub.s32 1, %s5
  %s8 = scalar_select 0, %s7, %s5
  $region1: #{tpu_custom_call.1} parent=0
    #allocation2 [shape = 'u8[8192]{0}', space=vmem, size = 0x2000, scoped, tag = 'input window, operand 0, single buffered']
    #allocation3 [shape = 's32[1]{0}', space=sflag, size = 0x4, scoped, tag = 'scoped memory for tpu_custom_call.1']
    #allocation4 [shape = 's32[1]{0}', space=sflag, size = 0x4, scoped, tag = 'scoped memory for tpu_custom_call.1']
    #allocation5 [shape = 'u8[8192]{0}', space=vmem, size = 0x2000, scoped, tag = 'input window, operand 1, single buffered']
    #allocation6 [shape = 's32[1]{0}', space=sflag, size = 0x4, scoped, tag = 'scoped memory for tpu_custom_call.1']
    #allocation7 [shape = 'u8[4096]{0}', space=vmem, size = 0x1000, scoped, tag = 'output window, operand 0, single buffered']
    #allocation8 [shape = 'u8[4096]{0}', space=vmem, size = 0x1000, scoped, tag = 'output window, operand 1, single buffered']
    #allocation9 [shape = 's32[1]{0}', space=sflag, size = 0x4, scoped, tag = 'scoped memory for tpu_custom_call.1']
    %9 = vsyncpa [#allocation3], 0
    %10 = vsyncpa [#allocation6], 0
    %11 = vsyncpa [#allocation4], 0
    %12 = vsyncpa [#allocation9], 0
    // Predicated region
    $region2: #{tpu_custom_call.1} parent=1 // pred_check
      _
    $region3: #{tpu_custom_call.1} parent=1 // pred_check_branch
      %14 = sbr.rel (0) target = $region5
    $region4: #{tpu_custom_call.1} parent=1 // pred_region
      %s15 = sadd.s32 0, 0
      %p16 = scmp.lt.s32.totalorder %s15, 0
      %s17 = scalar_select %p16, %s15, 0
      %s18 = smul.u32 2, %s17
      %s20 = ssub.s32 256, 256
      %21 = vsyncadd [#allocation3], %s20
      %s22 = smul.addr %s18, 128
      %s23 = scalar_lea.hbm %s0, %s22
      %s24 = sshll.u32 [#allocation2], 4
      %s25 = int_to_ptr.vmem [resolvable:$true] %s24
      %30 = dma.hbm_to_vmem [thread:$0]  %s23, 256, %s25, [#allocation3], 128, 128, 8
    $region5: #{tpu_custom_call.1} parent=1 // pred_fallthru
      _
    // Predicated region
    $region6: #{tpu_custom_call.1} parent=1 // pred_check
      _
    $region7: #{tpu_custom_call.1} parent=1 // pred_check_branch
      %32 = sbr.rel (0) target = $region9
    $region8: #{tpu_custom_call.1} parent=1 // pred_region
      %s33 = sadd.s32 0, 0
      %p34 = scmp.lt.s32.totalorder %s33, 0
      %s35 = scalar_select %p34, %s33, 0
      %s36 = smul.u32 2, %s35
      %s38 = ssub.s32 256, 256
      %39 = vsyncadd [#allocation6], %s38
      %s40 = smul.addr %s36, 128
      %s41 = scalar_lea.hbm %s1, %s40
      %s42 = sshll.u32 [#allocation5], 4
      %s43 = int_to_ptr.vmem [resolvable:$true] %s42
      %48 = dma.hbm_to_vmem [thread:$0]  %s41, 256, %s43, [#allocation6], 128, 128, 8
    $region9: #{tpu_custom_call.1} parent=1 // pred_fallthru
      _
    // Predicated region
    $region10: #{tpu_custom_call.1} parent=1 // pred_check
      _
    $region11: #{tpu_custom_call.1} parent=1 // pred_check_branch
      %50 = sbr.rel (0) target = $region13
    $region12: #{tpu_custom_call.1} parent=1 // pred_region
      %51 = dma.done [#allocation3], 256
    $region13: #{tpu_custom_call.1} parent=1 // pred_fallthru
      _
    // Predicated region
    $region14: #{tpu_custom_call.1} parent=1 // pred_check
      _
    $region15: #{tpu_custom_call.1} parent=1 // pred_check_branch
      %53 = sbr.rel (0) target = $region17
    $region16: #{tpu_custom_call.1} parent=1 // pred_region
      %54 = dma.done [#allocation6], 256
    $region17: #{tpu_custom_call.1} parent=1 // pred_fallthru
      _
    %s55 = sadd.s32 0, 0
    %p56 = scmp.lt.s32.totalorder %s55, 0
    %s57 = scalar_select %p56, %s55, 0
    %s58 = smul.u32 2, %s57
    %s59 = sadd.s32 0, 0
    %p60 = scmp.lt.s32.totalorder %s59, 0
    %s61 = scalar_select %p60, %s59, 0
    %s62 = smul.u32 2, %s61
    %s63 = sadd.s32 0, 0
    %p64 = scmp.eq.s32.totalorder 0, 0
    // Predicated region
    $region18: #{tpu_custom_call.1} parent=1 // pred_check
      %p65 = pneg %p64
    $region19: #{tpu_custom_call.1} parent=1 // pred_check_branch
      %67 = sbr.rel (%p65) target = $region21
    $region20: #{tpu_custom_call.1} parent=1 // pred_region
      %68 = vst [vmem:[#allocation7] sm:$0xff] 0.0
      %69 = vst [vmem:[#allocation8] sm:$0xff] 0.0
    $region21: #{tpu_custom_call.1} parent=1 // pred_fallthru
      _
    %p70 = scmp.lt.s32.totalorder %s63, 1
    // Predicated region
    $region22: #{tpu_custom_call.1} parent=1 // pred_check
      %p71 = pneg %p70
    $region23: #{tpu_custom_call.1} parent=1 // pred_check_branch
      %73 = sbr.rel (%p71) target = $region25
    $region24: #{tpu_custom_call.1} parent=1 // pred_region
      %v74 = vld [vmem:[#allocation2] sm:$0xff]
      %v75 = vld [vmem:[#allocation5] sm:$0xff]
      %v76 = vmul.f32 %v74, %v75
      %v77 = vadd.f32 %v76, 0.0
      %v78 = vadd.f32 %v77, 0.0
      %v79 = vadd.f32 %v74, %v75
      %v80 = vadd.f32 %v79, 0.0
      %v81 = vadd.f32 %v80, 0.0
      %s82 = scalar_lea.vmem [#allocation2], 8
      %v83 = vld [vmem:[%s82] sm:$0xff]
      %s84 = scalar_lea.vmem [#allocation5], 8
      %v85 = vld [vmem:[%s84] sm:$0xff]
      %v86 = vmul.f32 %v83, %v85
      %v87 = vadd.f32 %v86, 0.0
      %v88 = vadd.f32 %v78, %v87
      %v89 = vadd.f32 %v83, %v85
      %v90 = vadd.f32 %v89, 0.0
      %v91 = vadd.f32 %v81, %v90
      %v92 = vld [vmem:[#allocation7] sm:$0xff]
      %v93 = vadd.f32 %v92, %v88
      %94 = vst [vmem:[#allocation7] sm:$0xff] %v93
      %v95 = vld [vmem:[#allocation8] sm:$0xff]
      %v96 = vadd.f32 %v95, %v91
      %97 = vst [vmem:[#allocation8] sm:$0xff] %v96
    $region25: #{tpu_custom_call.1} parent=1 // pred_fallthru
      _
    %p98 = scmp.ge.s32.totalorder %s63, 1
    // Predicated region
    $region26: #{tpu_custom_call.1} parent=1 // pred_check
      %p99 = pneg %p98
    $region27: #{tpu_custom_call.1} parent=1 // pred_check_branch
      %101 = sbr.rel (%p99) target = $region29
    $region28: #{tpu_custom_call.1} parent=1 // pred_region
      %v102 = vld [vmem:[#allocation2] sm:$0xff]
      %v103 = vld [vmem:[#allocation2 + $0x8] sm:$0xff]
      %v104 = vld [vmem:[#allocation5] sm:$0xff]
      %v105 = vld [vmem:[#allocation5 + $0x8] sm:$0xff]
      %v106 = vlaneseq
      %v107 = vshrl.u32 %v106, 7
      %v108 = vadd.s32 %v107, 8
      %s109 = smul.u32 %s63, 16
      %v110 = vstv %s109
      %v111 = vadd.s32 %v107, %v110
      %v112 = vadd.s32 %v108, %v110
      %vm113 = vcmp.lt.s32.totalorder %v111, 16
      %vm114 = vcmp.lt.s32.totalorder %v112, 16
      %v115 = vsel %vm113, %v102, 0.0
      %v116 = vsel %vm114, %v103, 0.0
      %v117 = vsel %vm113, %v104, 0.0
      %v118 = vsel %vm114, %v105, 0.0
      %v119 = vld [vmem:[#allocation7] sm:$0xff]
      %v120 = vmul.f32 %v115, %v117
      %v121 = vmul.f32 %v116, %v118
      %v122 = vadd.f32 %v120, %v121
      %v123 = vadd.f32 %v119, %v122
      %124 = vst [vmem:[#allocation7] sm:$0xff] %v123
      %v125 = vld [vmem:[#allocation8] sm:$0xff]
      %v126 = vadd.f32 %v115, %v117
      %v127 = vadd.f32 %v116, %v118
      %v128 = vadd.f32 %v126, %v127
      %v129 = vadd.f32 %v125, %v128
      %130 = vst [vmem:[#allocation8] sm:$0xff] %v129
    $region29: #{tpu_custom_call.1} parent=1 // pred_fallthru
      _
    // Predicated region
    $region30: #{tpu_custom_call.1} parent=1 // pred_check
      _
    $region31: #{tpu_custom_call.1} parent=1 // pred_check_branch
      %132 = sbr.rel (0) target = $region33
    $region32: #{tpu_custom_call.1} parent=1 // pred_region
      %s134 = ssub.s32 128, 128
      %135 = vsyncadd [#allocation4], %s134
      %s137 = sshll.u32 [#allocation7], 4
      %s138 = int_to_ptr.vmem [resolvable:$true] %s137
      %140 = dma.vmem_to_hbm [thread:$0]  %s138, 128, %s2, [#allocation4]
    $region33: #{tpu_custom_call.1} parent=1 // pred_fallthru
      _
    // Predicated region
    $region34: #{tpu_custom_call.1} parent=1 // pred_check
      _
    $region35: #{tpu_custom_call.1} parent=1 // pred_check_branch
      %142 = sbr.rel (0) target = $region37
    $region36: #{tpu_custom_call.1} parent=1 // pred_region
      %s144 = ssub.s32 128, 128
      %145 = vsyncadd [#allocation9], %s144
      %s147 = sshll.u32 [#allocation8], 4
      %s148 = int_to_ptr.vmem [resolvable:$true] %s147
      %150 = dma.vmem_to_hbm [thread:$0]  %s148, 128, %s3, [#allocation9]
    $region37: #{tpu_custom_call.1} parent=1 // pred_fallthru
      _
    // Predicated region
    $region38: #{tpu_custom_call.1} parent=1 // pred_check
      _
    $region39: #{tpu_custom_call.1} parent=1 // pred_check_branch
      %152 = sbr.rel (0) target = $region41
    $region40: #{tpu_custom_call.1} parent=1 // pred_region
      %153 = dma.done [#allocation4], 128
    $region41: #{tpu_custom_call.1} parent=1 // pred_fallthru
      _
    // Predicated region
    $region42: #{tpu_custom_call.1} parent=1 // pred_check
      _
    $region43: #{tpu_custom_call.1} parent=1 // pred_check_branch
      %155 = sbr.rel (0) target = $region45
    $region44: #{tpu_custom_call.1} parent=1 // pred_region
      %156 = dma.done [#allocation9], 128
    $region45: #{tpu_custom_call.1} parent=1 // pred_fallthru
      _
    %157 = vsyncpa [#allocation3], 1
    %158 = vsyncpa [#allocation6], 1
    %159 = vsyncpa [#allocation4], 1
    %160 = vsyncpa [#allocation9], 1

</llo_original>
